<compile_context>
chip_gen: v7x
topology: tpu7x:2x2x1
jax: 0.10.0
libtpu: 0.0.40
codegen_flags: <defaults>
</compile_context>

<pallas_src>
import jax
import jax.numpy as jnp
from jax.experimental import pallas as pl
from jax.experimental.pallas import tpu as pltpu


def mlp_kernel(x_ref, w1_ref, b1_ref, w2_ref, b2_ref, o_ref):
    # ---- fclayer1: x @ W1 + b1 (MXU, f32 accumulate; bias add in f32) ----
    h = jnp.dot(x_ref[...], w1_ref[...], preferred_element_type=jnp.float32)
    h = h + b1_ref[...]                     # (1, mlp_dim) broadcasts over rows

    # ---- softmax numerator / denominator over the feature (lane) axis ----
    m = jnp.max(h, axis=-1, keepdims=True)
    e = jnp.exp(h - m)
    denom = jnp.sum(e, axis=-1, keepdims=True)

    # ---- dropout(0.1): identity in eval mode ----

    # ---- fclayer2 with softmax normalization deferred past the matmul ----
    # (e / denom) @ W2 + b2 == (e @ W2) * (1/denom) + b2
    out = jnp.dot(e.astype(w2_ref.dtype), w2_ref[...],
                  preferred_element_type=jnp.float32)
    inv = pl.reciprocal(denom, approx=False)   # exact: error stays bounded
    out = out * inv + b2_ref[...]

    # ---- dropout(0.1): identity in eval mode ----
    o_ref[...] = out.astype(o_ref.dtype)


def _vmem_capacity_bytes():
    """Per-core VMEM capacity; conservative (v7x = 64 MiB) fallback."""
    try:
        return int(pltpu.get_tpu_info().vmem_capacity_bytes)
    except Exception:
        return 64 * 2**20


def _choose_tile_b(B, dim, mlp_dim, cc_pad, op_isz, out_isz, budget, resident):
    """Derive the batch tile from the VMEM budget."""
    per_row = 3 * dim * op_isz + 2 * cc_pad * out_isz   # x (<=3 bufs) + out (2)
    avail = max(budget - resident, 8 * per_row)
    max_rows = max(int(avail // per_row), 8)
    b8 = ((B + 7) // 8) * 8
    tile = min(b8, max_rows, 2048)
    if tile >= 512:
        tile = (tile // 256) * 256        # v6e/v7x MXU is 2x256^2
    else:
        tile = max((tile // 8) * 8, 8)
    # Megacore: only split into >=2 grid steps when per-core work is large
    # enough to beat the extra per-step overhead / prologue.
    flops = 2 * B * mlp_dim * (dim + cc_pad)
    if tile >= b8 and flops > 2e8:
        tile = max((((b8 // 2) + 7) // 8) * 8, 8)
    return tile


def mlp_forward(x, w1, b1, w2, b2, *, tile_b=None, matmul_dtype=None,
                out_dtype=None):
    B, dim = x.shape
    mlp_dim = w1.shape[1]
    class_count = w2.shape[1]
    out_dtype = out_dtype or x.dtype

    # ---- lane-dense output: zero-pad class_count up to a multiple of 128 ----
    cc_pad = ((class_count + 127) // 128) * 128
    if cc_pad != class_count:
        w2 = jnp.pad(w2, ((0, 0), (0, cc_pad - class_count)))
        b2 = jnp.pad(b2, ((0, 0), (0, cc_pad - class_count)))

    # Matmul operands may be bf16 on any generation (v5e MXU is bf16-native);
    # bias adds and all softmax math stay f32 inside the kernel.
    if matmul_dtype is not None:
        x = x.astype(matmul_dtype)
        w1 = w1.astype(matmul_dtype)
        w2 = w2.astype(matmul_dtype)
    b1 = b1.astype(jnp.float32)
    b2 = b2.astype(jnp.float32)

    op_isz = x.dtype.itemsize
    out_isz = jnp.dtype(out_dtype).itemsize
    weight_bytes = (dim * mlp_dim + mlp_dim * cc_pad) * op_isz
    bias_bytes = (mlp_dim + cc_pad) * 4

    capacity = _vmem_capacity_bytes()
    budget = int(0.6 * capacity)
    # Weights are held fully VMEM-resident (single-buffered).
    # TODO(synk): tile mlp_dim on a trailing "arbitrary" grid axis (two-pass
    # softmax + f32 accumulator) when W1+W2 do not fit VMEM-resident.
    assert weight_bytes + bias_bytes < budget, (
        f"W1+W2 ({weight_bytes / 2**20:.1f} MiB) exceed the VMEM budget "
        f"({budget / 2**20:.1f} MiB) on this TPU generation; reduce "
        f"dim/mlp_dim, use matmul_dtype=jnp.bfloat16, or add mlp_dim tiling.")

    if tile_b is None:
        tile_b = _choose_tile_b(B, dim, mlp_dim, cc_pad, op_isz, out_isz,
                                budget, weight_bytes + bias_bytes)
    grid_steps = -(-B // tile_b)
    B_pad = grid_steps * tile_b
    if B_pad != B:
        x = jnp.pad(x, ((0, B_pad - B), (0, 0)))

    # Advisory cost estimate for the surrounding XLA schedule.
    cost = pl.CostEstimate(
        flops=2 * B_pad * mlp_dim * (dim + cc_pad),
        transcendentals=B_pad * mlp_dim,
        bytes_accessed=(B_pad * dim * op_isz + weight_bytes
                        + B_pad * cc_pad * out_isz),
    )

    # Generation-aware VMEM limit, with headroom for the no-Buffered fallback
    # path (which double-buffers the weights).
    x_bufs = 3 if grid_steps >= 4 else 2
    need = (2 * weight_bytes + bias_bytes
            + tile_b * (x_bufs * dim * op_isz + 2 * cc_pad * out_isz))
    vmem_limit = int(min(0.85 * capacity, max(2 * need, 16 * 2**20)))

    def _spec(shape, index_map, buffers):
        if buffers is None:
            return pl.BlockSpec(shape, index_map)
        try:
            return pl.BlockSpec(shape, index_map,
                                pipeline_mode=pl.Buffered(buffers))
        except TypeError:        # Pallas version without pipeline_mode kwarg
            return pl.BlockSpec(shape, index_map)

    def _build(use_buffering):
        wbuf = 1 if use_buffering else None       # constant index_map -> 1 buf
        xbuf = x_bufs if (use_buffering and x_bufs != 2) else None
        return pl.pallas_call(
            mlp_kernel,
            out_shape=jax.ShapeDtypeStruct((B_pad, cc_pad), out_dtype),
            grid_spec=pltpu.PrefetchScalarGridSpec(
                num_scalar_prefetch=0,
                grid=(grid_steps,),
                in_specs=[
                    _spec((tile_b, dim), lambda i: (i, 0), xbuf),       # x
                    _spec((dim, mlp_dim), lambda i: (0, 0), wbuf),      # W1
                    _spec((1, mlp_dim), lambda i: (0, 0), wbuf),        # b1
                    _spec((mlp_dim, cc_pad), lambda i: (0, 0), wbuf),   # W2
                    _spec((1, cc_pad), lambda i: (0, 0), wbuf),         # b2
                ],
                out_specs=pl.BlockSpec((tile_b, cc_pad), lambda i: (i, 0)),
            ),
            compiler_params=pltpu.CompilerParams(
                dimension_semantics=("parallel",),
                vmem_limit_bytes=vmem_limit),
            cost_estimate=cost,
        )

    try:
        out_padded = _build(True)(x, w1, b1, w2, b2)
    except Exception:
        # Fall back to default double-buffering if Buffered(k) is rejected.
        out_padded = _build(False)(x, w1, b1, w2, b2)

    # Drop padded batch rows and the zero-padded output columns.
    return out_padded[:B, :class_count]


def init_params(key, dim, mlp_dim, class_count, dtype=jnp.float32):
    k1, k2, k3, k4 = jax.random.split(key, 4)
    # PyTorch nn.Linear init: U(-1/sqrt(fan_in), 1/sqrt(fan_in))
    bound1 = 1.0 / (dim ** 0.5)
    bound2 = 1.0 / (mlp_dim ** 0.5)
    w1 = jax.random.uniform(k1, (dim, mlp_dim), dtype, -bound1, bound1)
    b1 = jax.random.uniform(k2, (1, mlp_dim), dtype, -bound1, bound1)
    w2 = jax.random.uniform(k3, (mlp_dim, class_count), dtype, -bound2, bound2)
    b2 = jax.random.uniform(k4, (1, class_count), dtype, -bound2, bound2)
    return w1, b1, w2, b2


def mlp_reference(x, w1, b1, w2, b2):
    h = x @ w1 + b1
    s = jax.nn.softmax(h, axis=-1)
    return s @ w2 + b2


if __name__ == "__main__":
    dim, mlp_dim, class_count = 32, 64, 16
    batch = 64

    key = jax.random.PRNGKey(0)
    kx, kp = jax.random.split(key)
    x = jax.random.normal(kx, (batch, dim), jnp.float32)
    w1, b1, w2, b2 = init_params(kp, dim, mlp_dim, class_count)

    # f32 operands here for a tight correctness check; pass
    # matmul_dtype=jnp.bfloat16 for throughput on v5e/v6e/v7x.
    out = mlp_forward(x, w1, b1, w2, b2)
    out = jax.block_until_ready(out)

    ref = mlp_reference(x, w1, b1, w2, b2)
    assert out.shape == (batch, class_count)
    assert jnp.allclose(out, ref, atol=2e-3, rtol=2e-3), "mismatch vs reference"

    print("KERNEL_OK")
</pallas_src>

<mosaic_0001>
module attributes {stable_mosaic.version = 11 : i64} {
  func.func @mlp_kernel(%arg0: i32, %arg1: memref<64x32xf32, #tpu.memory_space<vmem>>, %arg2: memref<32x64xf32, #tpu.memory_space<vmem>>, %arg3: memref<1x64xf32, #tpu.memory_space<vmem>>, %arg4: memref<64x128xf32, #tpu.memory_space<vmem>>, %arg5: memref<1x128xf32, #tpu.memory_space<vmem>>, %arg6: memref<64x128xf32, #tpu.memory_space<vmem>>) attributes {dimension_semantics = [#tpu.dimension_semantics<parallel>], iteration_bounds = array<i64: 1>, scalar_prefetch = 0 : i64, scratch_operands = 0 : i64, tpu.core_type = #tpu.core_type<tc>, window_params = [{transform_indices = @transform_0, window_bounds = array<i64: 64, 32>}, {pipeline_mode = #tpu.pipeline_mode<synchronous>, transform_indices = @transform_1, window_bounds = array<i64: 32, 64>}, {pipeline_mode = #tpu.pipeline_mode<synchronous>, transform_indices = @transform_2, window_bounds = array<i64: 1, 64>}, {pipeline_mode = #tpu.pipeline_mode<synchronous>, transform_indices = @transform_3, window_bounds = array<i64: 64, 128>}, {pipeline_mode = #tpu.pipeline_mode<synchronous>, transform_indices = @transform_4, window_bounds = array<i64: 1, 128>}, {transform_indices = @transform_5, window_bounds = array<i64: 64, 128>}]} {
    %c0 = arith.constant 0 : index
    %c0_0 = arith.constant 0 : index
    %0 = vector.load %arg1[%c0, %c0_0] : memref<64x32xf32, #tpu.memory_space<vmem>>, vector<64x32xf32>
    %c0_1 = arith.constant 0 : index
    %c0_2 = arith.constant 0 : index
    %1 = vector.load %arg2[%c0_1, %c0_2] : memref<32x64xf32, #tpu.memory_space<vmem>>, vector<32x64xf32>
    %cst = arith.constant dense<0.000000e+00> : vector<64x64xf32>
    %2 = tpu.matmul %0, %1, %cst {dimension_numbers = #tpu.dot_dimension_numbers<[1], [0], [0], [1], [0, 0, 1, 1], [], []>} : vector<64x32xf32>, vector<32x64xf32>, vector<64x64xf32> -> vector<64x64xf32>
    %c0_3 = arith.constant 0 : index
    %c0_4 = arith.constant 0 : index
    %3 = vector.load %arg3[%c0_3, %c0_4] : memref<1x64xf32, #tpu.memory_space<vmem>>, vector<1x64xf32>
    %4 = vector.broadcast %3 : vector<1x64xf32> to vector<64x64xf32>
    %5 = arith.addf %2, %4 : vector<64x64xf32>
    %cst_5 = arith.constant dense<0xFF800000> : vector<64xf32>
    %6 = vector.multi_reduction <maximumf>, %5, %cst_5 [1] : vector<64x64xf32> to vector<64xf32>
    %7 = vector.shape_cast %6 : vector<64xf32> to vector<64x1xf32>
    %8 = vector.broadcast %7 : vector<64x1xf32> to vector<64x64xf32>
    %9 = arith.subf %5, %8 : vector<64x64xf32>
    %10 = math.exp %9 : vector<64x64xf32>
    %cst_6 = arith.constant dense<0.000000e+00> : vector<64xf32>
    %11 = vector.multi_reduction <add>, %10, %cst_6 [1] : vector<64x64xf32> to vector<64xf32>
    %12 = vector.shape_cast %11 : vector<64xf32> to vector<64x1xf32>
    %c0_7 = arith.constant 0 : index
    %c0_8 = arith.constant 0 : index
    %13 = vector.load %arg4[%c0_7, %c0_8] : memref<64x128xf32, #tpu.memory_space<vmem>>, vector<64x128xf32>
    %cst_9 = arith.constant dense<0.000000e+00> : vector<64x128xf32>
    %14 = tpu.matmul %10, %13, %cst_9 {dimension_numbers = #tpu.dot_dimension_numbers<[1], [0], [0], [1], [0, 0, 1, 1], [], []>} : vector<64x64xf32>, vector<64x128xf32>, vector<64x128xf32> -> vector<64x128xf32>
    %15 = tpu.reciprocal %12 : vector<64x1xf32> -> vector<64x1xf32>
    %16 = vector.broadcast %15 : vector<64x1xf32> to vector<64x128xf32>
    %17 = arith.mulf %14, %16 : vector<64x128xf32>
    %c0_10 = arith.constant 0 : index
    %c0_11 = arith.constant 0 : index
    %18 = vector.load %arg5[%c0_10, %c0_11] : memref<1x128xf32, #tpu.memory_space<vmem>>, vector<1x128xf32>
    %19 = vector.broadcast %18 : vector<1x128xf32> to vector<64x128xf32>
    %20 = arith.addf %17, %19 : vector<64x128xf32>
    %c0_12 = arith.constant 0 : index
    %c0_13 = arith.constant 0 : index
    %21 = vector.load %arg6[%c0_12, %c0_13] : memref<64x128xf32, #tpu.memory_space<vmem>>, vector<64x128xf32>
    tpu.vector_store %arg6[%c0_12, %c0_13], %20 {strides = array<i32>} : memref<64x128xf32, #tpu.memory_space<vmem>>, vector<64x128xf32>,
    return
  }
  func.func @transform_0(%arg0: i32) -> (i32, i32) {
    %c0_i32 = arith.constant 0 : i32
    %c0_i32_0 = arith.constant 0 : i32
    return %arg0, %c0_i32 : i32, i32
  }
  func.func @transform_1(%arg0: i32) -> (i32, i32) {
    %c0_i32 = arith.constant 0 : i32
    %c0_i32_0 = arith.constant 0 : i32
    %c0_i32_1 = arith.constant 0 : i32
    return %c0_i32, %c0_i32_0 : i32, i32
  }
  func.func @transform_2(%arg0: i32) -> (i32, i32) {
    %c0_i32 = arith.constant 0 : i32
    %c0_i32_0 = arith.constant 0 : i32
    %c0_i32_1 = arith.constant 0 : i32
    return %c0_i32, %c0_i32_0 : i32, i32
  }
  func.func @transform_3(%arg0: i32) -> (i32, i32) {
    %c0_i32 = arith.constant 0 : i32
    %c0_i32_0 = arith.constant 0 : i32
    %c0_i32_1 = arith.constant 0 : i32
    return %c0_i32, %c0_i32_0 : i32, i32
  }
  func.func @transform_4(%arg0: i32) -> (i32, i32) {
    %c0_i32 = arith.constant 0 : i32
    %c0_i32_0 = arith.constant 0 : i32
    %c0_i32_1 = arith.constant 0 : i32
    return %c0_i32, %c0_i32_0 : i32, i32
  }
  func.func @transform_5(%arg0: i32) -> (i32, i32) {
    %c0_i32 = arith.constant 0 : i32
    %c0_i32_0 = arith.constant 0 : i32
    return %arg0, %c0_i32 : i32, i32
  }
}

module attributes {stable_mosaic.version = 11 : i64} {
  func.func @mlp_kernel(%arg0: i32, %arg1: memref<64x32xf32, #tpu.memory_space<vmem>>, %arg2: memref<32x64xf32, #tpu.memory_space<vmem>>, %arg3: memref<1x64xf32, #tpu.memory_space<vmem>>, %arg4: memref<64x128xf32, #tpu.memory_space<vmem>>, %arg5: memref<1x128xf32, #tpu.memory_space<vmem>>, %arg6: memref<64x128xf32, #tpu.memory_space<vmem>>) attributes {dimension_semantics = [#tpu.dimension_semantics<parallel>], iteration_bounds = array<i64: 1>, scalar_prefetch = 0 : i64, scratch_operands = 0 : i64, tpu.core_type = #tpu.core_type<tc>, window_params = [{transform_indices = @transform_0, window_bounds = array<i64: 64, 32>}, {pipeline_mode = #tpu.pipeline_mode<synchronous>, transform_indices = @transform_1, window_bounds = array<i64: 32, 64>}, {pipeline_mode = #tpu.pipeline_mode<synchronous>, transform_indices = @transform_2, window_bounds = array<i64: 1, 64>}, {pipeline_mode = #tpu.pipeline_mode<synchronous>, transform_indices = @transform_3, window_bounds = array<i64: 64, 128>}, {pipeline_mode = #tpu.pipeline_mode<synchronous>, transform_indices = @transform_4, window_bounds = array<i64: 1, 128>}, {transform_indices = @transform_5, window_bounds = array<i64: 64, 128>}]} {
    %c0 = arith.constant 0 : index
    %c0_0 = arith.constant 0 : index
    %0 = vector.load %arg1[%c0, %c0_0] : memref<64x32xf32, #tpu.memory_space<vmem>>, vector<64x32xf32>
    %c0_1 = arith.constant 0 : index
    %c0_2 = arith.constant 0 : index
    %1 = vector.load %arg2[%c0_1, %c0_2] : memref<32x64xf32, #tpu.memory_space<vmem>>, vector<32x64xf32>
    %cst = arith.constant dense<0.000000e+00> : vector<64x64xf32>
    %2 = tpu.matmul %0, %1, %cst {dimension_numbers = #tpu.dot_dimension_numbers<[1], [0], [0], [1], [0, 0, 1, 1], [], []>} : vector<64x32xf32>, vector<32x64xf32>, vector<64x64xf32> -> vector<64x64xf32>
    %c0_3 = arith.constant 0 : index
    %c0_4 = arith.constant 0 : index
    %3 = vector.load %arg3[%c0_3, %c0_4] : memref<1x64xf32, #tpu.memory_space<vmem>>, vector<1x64xf32>
    %4 = vector.broadcast %3 : vector<1x64xf32> to vector<64x64xf32>
    %5 = arith.addf %2, %4 : vector<64x64xf32>
    %cst_5 = arith.constant dense<0xFF800000> : vector<64xf32>
    %6 = vector.multi_reduction <maximumf>, %5, %cst_5 [1] : vector<64x64xf32> to vector<64xf32>
    %7 = vector.shape_cast %6 : vector<64xf32> to vector<64x1xf32>
    %8 = vector.broadcast %7 : vector<64x1xf32> to vector<64x64xf32>
    %9 = arith.subf %5, %8 : vector<64x64xf32>
    %10 = math.exp %9 : vector<64x64xf32>
    %cst_6 = arith.constant dense<0.000000e+00> : vector<64xf32>
    %11 = vector.multi_reduction <add>, %10, %cst_6 [1] : vector<64x64xf32> to vector<64xf32>
    %12 = vector.shape_cast %11 : vector<64xf32> to vector<64x1xf32>
    %c0_7 = arith.constant 0 : index
    %c0_8 = arith.constant 0 : index
    %13 = vector.load %arg4[%c0_7, %c0_8] : memref<64x128xf32, #tpu.memory_space<vmem>>, vector<64x128xf32>
    %cst_9 = arith.constant dense<0.000000e+00> : vector<64x128xf32>
    %14 = tpu.matmul %10, %13, %cst_9 {dimension_numbers = #tpu.dot_dimension_numbers<[1], [0], [0], [1], [0, 0, 1, 1], [], []>} : vector<64x64xf32>, vector<64x128xf32>, vector<64x128xf32> -> vector<64x128xf32>
    %15 = tpu.reciprocal %12 : vector<64x1xf32> -> vector<64x1xf32>
    %16 = vector.broadcast %15 : vector<64x1xf32> to vector<64x128xf32>
    %17 = arith.mulf %14, %16 : vector<64x128xf32>
    %c0_10 = arith.constant 0 : index
    %c0_11 = arith.constant 0 : index
    %18 = vector.load %arg5[%c0_10, %c0_11] : memref<1x128xf32, #tpu.memory_space<vmem>>, vector<1x128xf32>
    %19 = vector.broadcast %18 : vector<1x128xf32> to vector<64x128xf32>
    %20 = arith.addf %17, %19 : vector<64x128xf32>
    %c0_12 = arith.constant 0 : index
    %c0_13 = arith.constant 0 : index
    %21 = vector.load %arg6[%c0_12, %c0_13] : memref<64x128xf32, #tpu.memory_space<vmem>>, vector<64x128xf32>
    tpu.vector_store %arg6[%c0_12, %c0_13], %20 {strides = array<i32>} : memref<64x128xf32, #tpu.memory_space<vmem>>, vector<64x128xf32>,
    return
  }
  func.func @transform_0(%arg0: i32) -> (i32, i32) {
    %c0_i32 = arith.constant 0 : i32
    %c0_i32_0 = arith.constant 0 : i32
    return %arg0, %c0_i32 : i32, i32
  }
  func.func @transform_1(%arg0: i32) -> (i32, i32) {
    %c0_i32 = arith.constant 0 : i32
    %c0_i32_0 = arith.constant 0 : i32
    %c0_i32_1 = arith.constant 0 : i32
    return %c0_i32, %c0_i32_0 : i32, i32
  }
  func.func @transform_2(%arg0: i32) -> (i32, i32) {
    %c0_i32 = arith.constant 0 : i32
    %c0_i32_0 = arith.constant 0 : i32
    %c0_i32_1 = arith.constant 0 : i32
    return %c0_i32, %c0_i32_0 : i32, i32
  }
  func.func @transform_3(%arg0: i32) -> (i32, i32) {
    %c0_i32 = arith.constant 0 : i32
    %c0_i32_0 = arith.constant 0 : i32
    %c0_i32_1 = arith.constant 0 : i32
    return %c0_i32, %c0_i32_0 : i32, i32
  }
  func.func @transform_4(%arg0: i32) -> (i32, i32) {
    %c0_i32 = arith.constant 0 : i32
    %c0_i32_0 = arith.constant 0 : i32
    %c0_i32_1 = arith.constant 0 : i32
    return %c0_i32, %c0_i32_0 : i32, i32
  }
  func.func @transform_5(%arg0: i32) -> (i32, i32) {
    %c0_i32 = arith.constant 0 : i32
    %c0_i32_0 = arith.constant 0 : i32
    return %arg0, %c0_i32 : i32, i32
  }
}

</mosaic_0001>

<llo_original>
// kernel: tpu_custom_call.1
$region0: #{tpu_custom_call.1}
  #allocation0 [shape = 'u32[]', space=smem, size = 0x4, offset = 0x4, fixed_abs, tag = 'smem constant byte address 0x4 - core index']
  #allocation1 [shape = 'u32[144,128]{1,0:T(1,128)}', space=vmem, size = 0x12000, scoped, tag = 'internal scratch']
  %s0 = inlined_call_operand.vmem [shape: f32[64,32], index: 0, kind: input, shape index: {}]
  %s1 = inlined_call_operand.vmem [shape: f32[32,64], index: 1, kind: input, shape index: {}]
  %s2 = inlined_call_operand.vmem [shape: f32[1,64], index: 2, kind: input, shape index: {}]
  %s3 = inlined_call_operand.vmem [shape: f32[64,128], index: 3, kind: input, shape index: {}]
  %s4 = inlined_call_operand.vmem [shape: f32[1,128], index: 4, kind: input, shape index: {}]
  %s5 = inlined_call_operand.hbm [shape: f32[64,128], index: 5, kind: output, shape index: {}]
  %s6 = sld [smem:[#allocation0]]
  $region30: #{tpu_custom_call.1} parent=0
    _
  %s8 = ssub.s32 1, %s6
  %s9 = scalar_select 0, %s8, %s6
  $region1: #{tpu_custom_call.1} parent=0
    #allocation2 [shape = 'u8[32768]{0}', space=vmem, size = 0x8000, scoped, tag = 'output window, operand 0, single buffered']
    #allocation3 [shape = 's32[1]{0}', space=sflag, size = 0x4, scoped, tag = 'scoped memory for tpu_custom_call.1']
    %10 = vsyncpa [#allocation3], 0
    // Predicated region
    $region2: #{tpu_custom_call.1} parent=1 // pred_check
      _
    $region3: #{tpu_custom_call.1} parent=1 // pred_check_branch
      %12 = sbr.rel (0) target = $region5
    $region4: #{tpu_custom_call.1} parent=1 // pred_region
      _
    $region5: #{tpu_custom_call.1} parent=1 // pred_fallthru
      _
    // Predicated region
    $region6: #{tpu_custom_call.1} parent=1 // pred_check
      _
    $region7: #{tpu_custom_call.1} parent=1 // pred_check_branch
      %14 = sbr.rel (0) target = $region9
    $region8: #{tpu_custom_call.1} parent=1 // pred_region
      _
    $region9: #{tpu_custom_call.1} parent=1 // pred_fallthru
      _
    // Predicated region
    $region10: #{tpu_custom_call.1} parent=1 // pred_check
      _
    $region11: #{tpu_custom_call.1} parent=1 // pred_check_branch
      %16 = sbr.rel (0) target = $region13
    $region12: #{tpu_custom_call.1} parent=1 // pred_region
      _
    $region13: #{tpu_custom_call.1} parent=1 // pred_fallthru
      _
    // Predicated region
    $region14: #{tpu_custom_call.1} parent=1 // pred_check
      _
    $region15: #{tpu_custom_call.1} parent=1 // pred_check_branch
      %18 = sbr.rel (0) target = $region17
    $region16: #{tpu_custom_call.1} parent=1 // pred_region
      _
    $region17: #{tpu_custom_call.1} parent=1 // pred_fallthru
      _
    // Predicated region
    $region18: #{tpu_custom_call.1} parent=1 // pred_check
      _
    $region19: #{tpu_custom_call.1} parent=1 // pred_check_branch
      %20 = sbr.rel (0) target = $region21
    $region20: #{tpu_custom_call.1} parent=1 // pred_region
      _
    $region21: #{tpu_custom_call.1} parent=1 // pred_fallthru
      _
    %v21 = vld [vmem:[%s0] sm:$0xff]
    %v22 = vld [vmem:[%s0 + $0x8] sm:$0xff]
    %v23 = vld [vmem:[%s0 + $0x10] sm:$0xff]
    %v24 = vld [vmem:[%s0 + $0x18] sm:$0xff]
    %v25 = vld [vmem:[%s0 + $0x20] sm:$0xff]
    %v26 = vld [vmem:[%s0 + $0x28] sm:$0xff]
    %v27 = vld [vmem:[%s0 + $0x30] sm:$0xff]
    %v28 = vld [vmem:[%s0 + $0x38] sm:$0xff]
    %v29 = vld [vmem:[%s1] sm:$0xff]
    %v30 = vld [vmem:[%s1 + $0x8] sm:$0xff]
    %v31 = vld [vmem:[%s1 + $0x10] sm:$0xff]
    %v32 = vld [vmem:[%s1 + $0x18] sm:$0xff]
    %v33 = vld [vmem:[%s2] sm:$0x1]
    %v35 = vlaneseq
    %v36 = vshrl.u32 %v35, 7
    %v37 = vsub.s32 0, %v36
    %v38 = vrot.slane %v33, %v37
    %vm40 = vcmask 261120
    %v42 = vsel %vm40, %v21, 0
    %v45 = vsel %vm40, %v22, 0
    %v48 = vsel %vm40, %v23, 0
    %v51 = vsel %vm40, %v24, 0
    %v54 = vsel %vm40, %v25, 0
    %v57 = vsel %vm40, %v26, 0
    %v60 = vsel %vm40, %v27, 0
    %v63 = vsel %vm40, %v28, 0
    %65 = vmatprep.subr.mxu0 0.0
    %66 = vmatpush1.msra.mxu0 %v29
    %67 = vmatprep.subr.mxu0 0.0
    %68 = vmatpush1.msra.mxu0 %v30
    %69 = vmatprep.subr.mxu0 0.0
    %70 = vmatpush1.msra.mxu0 %v31
    %71 = vmatprep.subr.mxu0 0.0
    %72 = vmatpush1.msra.mxu0 %v32
    %73 = vmatprep.subr.mxu0 0.0
    %74 = vmatpush1.msra.mxu0 0.0
    %75 = vmatprep.subr.mxu0 0.0
    %76 = vmatpush1.msra.mxu0 0.0
    %77 = vmatprep.subr.mxu0 0.0
    %78 = vmatpush1.msra.mxu0 0.0
    %79 = vmatprep.subr.mxu0 0.0
    %80 = vmatpush1.msra.mxu0 0.0
    %81 = vmatprep.subr.mxu0 0.0
    %82 = vmatpush1.msra.mxu0 0.0
    %83 = vmatprep.subr.mxu0 0.0
    %84 = vmatpush1.msra.mxu0 0.0
    %85 = vmatprep.subr.mxu0 0.0
    %86 = vmatpush1.msra.mxu0 0.0
    %87 = vmatprep.subr.mxu0 0.0
    %88 = vmatpush1.msra.mxu0 0.0
    %89 = vmatprep.subr.mxu0 0.0
    %90 = vmatpush1.msra.mxu0 0.0
    %91 = vmatprep.subr.mxu0 0.0
    %92 = vmatpush1.msra.mxu0 0.0
    %93 = vmatprep.subr.mxu0 0.0
    %94 = vmatpush1.msra.mxu0 0.0
    %95 = vmatprep.subr.mxu0 0.0
    %96 = vmatpush1.msra.mxu0 0.0
    %97 = vmatprep.subr.mxu0 0.0
    %98 = vmatpush1.msra.mxu0 0.0
    %99 = vmatprep.subr.mxu0 0.0
    %100 = vmatpush1.msra.mxu0 0.0
    %101 = vmatprep.subr.mxu0 0.0
    %102 = vmatpush1.msra.mxu0 0.0
    %103 = vmatprep.subr.mxu0 0.0
    %104 = vmatpush1.msra.mxu0 0.0
    %105 = vmatprep.subr.mxu0 0.0
    %106 = vmatpush1.msra.mxu0 0.0
    %107 = vmatprep.subr.mxu0 0.0
    %108 = vmatpush1.msra.mxu0 0.0
    %109 = vmatprep.subr.mxu0 0.0
    %110 = vmatpush1.msra.mxu0 0.0
    %111 = vmatprep.subr.mxu0 0.0
    %112 = vmatpush1.msra.mxu0 0.0
    %113 = vmatprep.subr.mxu0 0.0
    %114 = vmatpush1.msra.mxu0 0.0
    %115 = vmatprep.subr.mxu0 0.0
    %116 = vmatpush1.msra.mxu0 0.0
    %117 = vmatprep.subr.mxu0 0.0
    %118 = vmatpush1.msra.mxu0 0.0
    %119 = vmatprep.subr.mxu0 0.0
    %120 = vmatpush1.msra.mxu0 0.0
    %121 = vmatprep.subr.mxu0 0.0
    %122 = vmatpush1.msra.mxu0 0.0
    %123 = vmatprep.subr.mxu0 0.0
    %124 = vmatpush1.msra.mxu0 0.0
    %125 = vmatprep.subr.mxu0 0.0
    %126 = vmatpush1.msra.mxu0 0.0
    %127 = vmatprep.subr.mxu0 0.0
    %128 = vmatpush1.msra.mxu0 0.0
    %129 = vmatprep.mubr.f32.mxu0 0.0
    %130 = vmatmul.mubr.f32.gmra.mrb[0].mxu0 %v42
    %v131 = vpop.f32.mrb[0].mxu0
    %v132 = vadd.f32 %v38, %v131
    %v133 = vpop.f32.mrb[0].mxu0
    %134 = vmatprep.mubr.f32.mxu0 0.0
    %135 = vmatmul.mubr.f32.gmra.mrb[0].mxu0 %v45
    %v136 = vpop.f32.mrb[0].mxu0
    %v137 = vadd.f32 %v38, %v136
    %v138 = vpop.f32.mrb[0].mxu0
    %139 = vmatprep.mubr.f32.mxu0 0.0
    %140 = vmatmul.mubr.f32.gmra.mrb[0].mxu0 %v48
    %v141 = vpop.f32.mrb[0].mxu0
    %v142 = vadd.f32 %v38, %v141
    %v143 = vpop.f32.mrb[0].mxu0
    %144 = vmatprep.mubr.f32.mxu0 0.0
    %145 = vmatmul.mubr.f32.gmra.mrb[0].mxu0 %v51
    %v146 = vpop.f32.mrb[0].mxu0
    %v147 = vadd.f32 %v38, %v146
    %v148 = vpop.f32.mrb[0].mxu0
    %149 = vmatprep.mubr.f32.mxu0 0.0
    %150 = vmatmul.mubr.f32.gmra.mrb[0].mxu0 %v54
    %v151 = vpop.f32.mrb[0].mxu0
    %v152 = vadd.f32 %v38, %v151
    %v153 = vpop.f32.mrb[0].mxu0
    %154 = vmatprep.mubr.f32.mxu0 0.0
    %155 = vmatmul.mubr.f32.gmra.mrb[0].mxu0 %v57
    %v156 = vpop.f32.mrb[0].mxu0
    %v157 = vadd.f32 %v38, %v156
    %v158 = vpop.f32.mrb[0].mxu0
    %159 = vmatprep.mubr.f32.mxu0 0.0
    %160 = vmatmul.mubr.f32.gmra.mrb[0].mxu0 %v60
    %v161 = vpop.f32.mrb[0].mxu0
    %v162 = vadd.f32 %v38, %v161
    %v163 = vpop.f32.mrb[0].mxu0
    %164 = vmatprep.mubr.f32.mxu0 0.0
    %165 = vmatmul.mubr.f32.gmra.mrb[0].mxu0 %v63
    %v166 = vpop.f32.mrb[0].mxu0
    %v167 = vadd.f32 %v38, %v166
    %v168 = vpop.f32.mrb[0].mxu0
    %169 = vdwg.mxu0
    %vm170 = vcmask 523264
    %v171 = vsel %vm170, %v132, -inf
    %172 = vmax.xlane.f32.xlu0 %v171
    %v173 = vpop.xlane.xlu0 %172
    %v174 = vsel %vm170, %v137, -inf
    %175 = vmax.xlane.f32.xlu0 %v174
    %v176 = vpop.xlane.xlu0 %175
    %v177 = vsel %vm170, %v142, -inf
    %178 = vmax.xlane.f32.xlu0 %v177
    %v179 = vpop.xlane.xlu0 %178
    %v180 = vsel %vm170, %v147, -inf
    %181 = vmax.xlane.f32.xlu0 %v180
    %v182 = vpop.xlane.xlu0 %181
    %v183 = vsel %vm170, %v152, -inf
    %184 = vmax.xlane.f32.xlu0 %v183
    %v185 = vpop.xlane.xlu0 %184
    %v186 = vsel %vm170, %v157, -inf
    %187 = vmax.xlane.f32.xlu0 %v186
    %v188 = vpop.xlane.xlu0 %187
    %v189 = vsel %vm170, %v162, -inf
    %190 = vmax.xlane.f32.xlu0 %v189
    %v191 = vpop.xlane.xlu0 %190
    %v192 = vsel %vm170, %v167, -inf
    %193 = vmax.xlane.f32.xlu0 %v192
    %v194 = vpop.xlane.xlu0 %193
    %v195 = vsub.f32 %v132, %v173
    %v196 = vsub.f32 %v137, %v176
    %v197 = vsub.f32 %v142, %v179
    %v198 = vsub.f32 %v147, %v182
    %v199 = vsub.f32 %v152, %v185
    %v200 = vsub.f32 %v157, %v188
    %v201 = vsub.f32 %v162, %v191
    %v202 = vsub.f32 %v167, %v194
    %v203 = vmul.f32 %v195, 1.442695
    %v204 = vpow.pop %v203
    %v205 = vmul.f32 %v196, 1.442695
    %v206 = vpow.pop %v205
    %v207 = vmul.f32 %v197, 1.442695
    %v208 = vpow.pop %v207
    %v209 = vmul.f32 %v198, 1.442695
    %v210 = vpow.pop %v209
    %v211 = vmul.f32 %v199, 1.442695
    %v212 = vpow.pop %v211
    %v213 = vmul.f32 %v200, 1.442695
    %v214 = vpow.pop %v213
    %v215 = vmul.f32 %v201, 1.442695
    %v216 = vpow.pop %v215
    %v217 = vmul.f32 %v202, 1.442695
    %v218 = vpow.pop %v217
    %v219 = vsel %vm170, %v204, 0.0
    %220 = vadd.xlane.f32.xlu0 %v219
    %v221 = vpop.xlane.xlu0 %220
    %v222 = vsel %vm170, %v206, 0.0
    %223 = vadd.xlane.f32.xlu0 %v222
    %v224 = vpop.xlane.xlu0 %223
    %v225 = vsel %vm170, %v208, 0.0
    %226 = vadd.xlane.f32.xlu0 %v225
    %v227 = vpop.xlane.xlu0 %226
    %v228 = vsel %vm170, %v210, 0.0
    %229 = vadd.xlane.f32.xlu0 %v228
    %v230 = vpop.xlane.xlu0 %229
    %v231 = vsel %vm170, %v212, 0.0
    %232 = vadd.xlane.f32.xlu0 %v231
    %v233 = vpop.xlane.xlu0 %232
    %v234 = vsel %vm170, %v214, 0.0
    %235 = vadd.xlane.f32.xlu0 %v234
    %v236 = vpop.xlane.xlu0 %235
    %v237 = vsel %vm170, %v216, 0.0
    %238 = vadd.xlane.f32.xlu0 %v237
    %v239 = vpop.xlane.xlu0 %238
    %v240 = vsel %vm170, %v218, 0.0
    %241 = vadd.xlane.f32.xlu0 %v240
    %v242 = vpop.xlane.xlu0 %241
    %v243 = vld [vmem:[%s3] sm:$0xff]
    %v244 = vld [vmem:[%s3 + $0x8] sm:$0xff]
    %v245 = vld [vmem:[%s3 + $0x10] sm:$0xff]
    %v246 = vld [vmem:[%s3 + $0x18] sm:$0xff]
    %v247 = vld [vmem:[%s3 + $0x20] sm:$0xff]
    %v248 = vld [vmem:[%s3 + $0x28] sm:$0xff]
    %v249 = vld [vmem:[%s3 + $0x30] sm:$0xff]
    %v250 = vld [vmem:[%s3 + $0x38] sm:$0xff]
    %v252 = vsel %vm170, %v204, 0
    %v255 = vsel %vm170, %v206, 0
    %v258 = vsel %vm170, %v208, 0
    %v261 = vsel %vm170, %v210, 0
    %v264 = vsel %vm170, %v212, 0
    %v267 = vsel %vm170, %v214, 0
    %v270 = vsel %vm170, %v216, 0
    %v273 = vsel %vm170, %v218, 0
    %275 = vmatprep.subr.mxu0 0.0
    %276 = vmatpush1.msra.mxu0 %v243
    %277 = vmatprep.subr.mxu0 0.0
    %278 = vmatpush1.msra.mxu0 %v244
    %279 = vmatprep.subr.mxu0 0.0
    %280 = vmatpush1.msra.mxu0 %v245
    %281 = vmatprep.subr.mxu0 0.0
    %282 = vmatpush1.msra.mxu0 %v246
    %283 = vmatprep.subr.mxu0 0.0
    %284 = vmatpush1.msra.mxu0 %v247
    %285 = vmatprep.subr.mxu0 0.0
    %286 = vmatpush1.msra.mxu0 %v248
    %287 = vmatprep.subr.mxu0 0.0
    %288 = vmatpush1.msra.mxu0 %v249
    %289 = vmatprep.subr.mxu0 0.0
    %290 = vmatpush1.msra.mxu0 %v250
    %291 = vmatprep.subr.mxu0 0.0
    %292 = vmatpush1.msra.mxu0 0.0
    %293 = vmatprep.subr.mxu0 0.0
    %294 = vmatpush1.msra.mxu0 0.0
    %295 = vmatprep.subr.mxu0 0.0
    %296 = vmatpush1.msra.mxu0 0.0
    %297 = vmatprep.subr.mxu0 0.0
    %298 = vmatpush1.msra.mxu0 0.0
    %299 = vmatprep.subr.mxu0 0.0
    %300 = vmatpush1.msra.mxu0 0.0
    %301 = vmatprep.subr.mxu0 0.0
    %302 = vmatpush1.msra.mxu0 0.0
    %303 = vmatprep.subr.mxu0 0.0
    %304 = vmatpush1.msra.mxu0 0.0
    %305 = vmatprep.subr.mxu0 0.0
    %306 = vmatpush1.msra.mxu0 0.0
    %307 = vmatprep.subr.mxu0 0.0
    %308 = vmatpush1.msra.mxu0 0.0
    %309 = vmatprep.subr.mxu0 0.0
    %310 = vmatpush1.msra.mxu0 0.0
    %311 = vmatprep.subr.mxu0 0.0
    %312 = vmatpush1.msra.mxu0 0.0
    %313 = vmatprep.subr.mxu0 0.0
    %314 = vmatpush1.msra.mxu0 0.0
    %315 = vmatprep.subr.mxu0 0.0
    %316 = vmatpush1.msra.mxu0 0.0
    %317 = vmatprep.subr.mxu0 0.0
    %318 = vmatpush1.msra.mxu0 0.0
    %319 = vmatprep.subr.mxu0 0.0
    %320 = vmatpush1.msra.mxu0 0.0
    %321 = vmatprep.subr.mxu0 0.0
    %322 = vmatpush1.msra.mxu0 0.0
    %323 = vmatprep.subr.mxu0 0.0
    %324 = vmatpush1.msra.mxu0 0.0
    %325 = vmatprep.subr.mxu0 0.0
    %326 = vmatpush1.msra.mxu0 0.0
    %327 = vmatprep.subr.mxu0 0.0
    %328 = vmatpush1.msra.mxu0 0.0
    %329 = vmatprep.subr.mxu0 0.0
    %330 = vmatpush1.msra.mxu0 0.0
    %331 = vmatprep.subr.mxu0 0.0
    %332 = vmatpush1.msra.mxu0 0.0
    %333 = vmatprep.subr.mxu0 0.0
    %334 = vmatpush1.msra.mxu0 0.0
    %335 = vmatprep.subr.mxu0 0.0
    %336 = vmatpush1.msra.mxu0 0.0
    %337 = vmatprep.subr.mxu0 0.0
    %338 = vmatpush1.msra.mxu0 0.0
    %339 = vmatprep.mubr.f32.mxu0 0.0
    %340 = vmatmul.mubr.f32.gmra.mrb[0].mxu0 %v252
    %v341 = vpop.f32.mrb[0].mxu0
    %v342 = vadd.f32 0.0, %v341
    %v343 = vpop.f32.mrb[0].mxu0
    %344 = vmatprep.mubr.f32.mxu0 0.0
    %345 = vmatmul.mubr.f32.gmra.mrb[0].mxu0 %v255
    %v346 = vpop.f32.mrb[0].mxu0
    %v347 = vadd.f32 0.0, %v346
    %v348 = vpop.f32.mrb[0].mxu0
    %349 = vmatprep.mubr.f32.mxu0 0.0
    %350 = vmatmul.mubr.f32.gmra.mrb[0].mxu0 %v258
    %v351 = vpop.f32.mrb[0].mxu0
    %v352 = vadd.f32 0.0, %v351
    %v353 = vpop.f32.mrb[0].mxu0
    %354 = vmatprep.mubr.f32.mxu0 0.0
    %355 = vmatmul.mubr.f32.gmra.mrb[0].mxu0 %v261
    %v356 = vpop.f32.mrb[0].mxu0
    %v357 = vadd.f32 0.0, %v356
    %v358 = vpop.f32.mrb[0].mxu0
    %359 = vmatprep.mubr.f32.mxu0 0.0
    %360 = vmatmul.mubr.f32.gmra.mrb[0].mxu0 %v264
    %v361 = vpop.f32.mrb[0].mxu0
    %v362 = vadd.f32 0.0, %v361
    %v363 = vpop.f32.mrb[0].mxu0
    %364 = vmatprep.mubr.f32.mxu0 0.0
    %365 = vmatmul.mubr.f32.gmra.mrb[0].mxu0 %v267
    %v366 = vpop.f32.mrb[0].mxu0
    %v367 = vadd.f32 0.0, %v366
    %v368 = vpop.f32.mrb[0].mxu0
    %369 = vmatprep.mubr.f32.mxu0 0.0
    %370 = vmatmul.mubr.f32.gmra.mrb[0].mxu0 %v270
    %v371 = vpop.f32.mrb[0].mxu0
    %v372 = vadd.f32 0.0, %v371
    %v373 = vpop.f32.mrb[0].mxu0
    %374 = vmatprep.mubr.f32.mxu0 0.0
    %375 = vmatmul.mubr.f32.gmra.mrb[0].mxu0 %v273
    %v376 = vpop.f32.mrb[0].mxu0
    %v377 = vadd.f32 0.0, %v376
    %v378 = vpop.f32.mrb[0].mxu0
    %379 = vdwg.mxu0
    %v380 = vrcp.pop %v221
    %v381 = vrcp.pop %v224
    %v382 = vrcp.pop %v227
    %v383 = vrcp.pop %v230
    %v384 = vrcp.pop %v233
    %v385 = vrcp.pop %v236
    %v386 = vrcp.pop %v239
    %v387 = vrcp.pop %v242
    %v388 = vmul.f32 %v342, %v380
    %v389 = vmul.f32 %v347, %v381
    %v390 = vmul.f32 %v352, %v382
    %v391 = vmul.f32 %v357, %v383
    %v392 = vmul.f32 %v362, %v384
    %v393 = vmul.f32 %v367, %v385
    %v394 = vmul.f32 %v372, %v386
    %v395 = vmul.f32 %v377, %v387
    %v396 = vld [vmem:[%s4] sm:$0x1]
    %v398 = vlaneseq
    %v399 = vshrl.u32 %v398, 7
    %v400 = vsub.s32 0, %v399
    %v401 = vrot.slane %v396, %v400
    %v403 = vadd.f32 %v388, %v401
    %v404 = vadd.f32 %v389, %v401
    %v405 = vadd.f32 %v390, %v401
    %v406 = vadd.f32 %v391, %v401
    %v407 = vadd.f32 %v392, %v401
    %v408 = vadd.f32 %v393, %v401
    %v409 = vadd.f32 %v394, %v401
    %v410 = vadd.f32 %v395, %v401
    %411 = vst [vmem:[#allocation2] sm:$0xff] %v403
    %412 = vst [vmem:[#allocation2 + $0x8] sm:$0xff] %v404
    %413 = vst [vmem:[#allocation2 + $0x10] sm:$0xff] %v405
    %414 = vst [vmem:[#allocation2 + $0x18] sm:$0xff] %v406
    %415 = vst [vmem:[#allocation2 + $0x20] sm:$0xff] %v407
    %416 = vst [vmem:[#allocation2 + $0x28] sm:$0xff] %v408
    %417 = vst [vmem:[#allocation2 + $0x30] sm:$0xff] %v409
    %418 = vst [vmem:[#allocation2 + $0x38] sm:$0xff] %v410
    // Predicated region
    $region22: #{tpu_custom_call.1} parent=1 // pred_check
      _
    $region23: #{tpu_custom_call.1} parent=1 // pred_check_branch
      %420 = sbr.rel (0) target = $region25
    $region24: #{tpu_custom_call.1} parent=1 // pred_region
      %s422 = ssub.s32 1024, 1024
      %423 = vsyncadd [#allocation3], %s422
      %s424 = sshll.u32 [#allocation2], 4
      %s425 = int_to_ptr.vmem [resolvable:$true] %s424
      %430 = dma.vmem_to_hbm [thread:$0]  %s425, 1024, %s5, [#allocation3], 128, 128, 8
    $region25: #{tpu_custom_call.1} parent=1 // pred_fallthru
      _
    // Predicated region
    $region26: #{tpu_custom_call.1} parent=1 // pred_check
      _
    $region27: #{tpu_custom_call.1} parent=1 // pred_check_branch
      %432 = sbr.rel (0) target = $region29
    $region28: #{tpu_custom_call.1} parent=1 // pred_region
      %433 = dma.done [#allocation3], 1024
    $region29: #{tpu_custom_call.1} parent=1 // pred_fallthru
      _
    %434 = vsyncpa [#allocation3], 1

// kernel: tpu_custom_call.1
$region0: #{tpu_custom_call.1}
  #allocation0 [shape = 'u32[]', space=smem, size = 0x4, offset = 0x4, fixed_abs, tag = 'smem constant byte address 0x4 - core index']
  #allocation1 [shape = 'u32[144,128]{1,0:T(1,128)}', space=vmem, size = 0x12000, scoped, tag = 'internal scratch']
  %s0 = inlined_call_operand.vmem [shape: f32[64,32], index: 0, kind: input, shape index: {}]
  %s1 = inlined_call_operand.vmem [shape: f32[32,64], index: 1, kind: input, shape index: {}]
  %s2 = inlined_call_operand.vmem [shape: f32[1,64], index: 2, kind: input, shape index: {}]
  %s3 = inlined_call_operand.vmem [shape: f32[64,128], index: 3, kind: input, shape index: {}]
  %s4 = inlined_call_operand.vmem [shape: f32[1,128], index: 4, kind: input, shape index: {}]
  %s5 = inlined_call_operand.hbm [shape: f32[64,128], index: 5, kind: output, shape index: {}]
  %s6 = sld [smem:[#allocation0]]
  $region30: #{tpu_custom_call.1} parent=0
    _
  %s8 = ssub.s32 1, %s6
  %s9 = scalar_select 0, %s8, %s6
  $region1: #{tpu_custom_call.1} parent=0
    #allocation2 [shape = 'u8[32768]{0}', space=vmem, size = 0x8000, scoped, tag = 'output window, operand 0, single buffered']
    #allocation3 [shape = 's32[1]{0}', space=sflag, size = 0x4, scoped, tag = 'scoped memory for tpu_custom_call.1']
    %10 = vsyncpa [#allocation3], 0
    // Predicated region
    $region2: #{tpu_custom_call.1} parent=1 // pred_check
      _
    $region3: #{tpu_custom_call.1} parent=1 // pred_check_branch
      %12 = sbr.rel (0) target = $region5
    $region4: #{tpu_custom_call.1} parent=1 // pred_region
      _
    $region5: #{tpu_custom_call.1} parent=1 // pred_fallthru
      _
    // Predicated region
    $region6: #{tpu_custom_call.1} parent=1 // pred_check
      _
    $region7: #{tpu_custom_call.1} parent=1 // pred_check_branch
      %14 = sbr.rel (0) target = $region9
    $region8: #{tpu_custom_call.1} parent=1 // pred_region
      _
    $region9: #{tpu_custom_call.1} parent=1 // pred_fallthru
      _
    // Predicated region
    $region10: #{tpu_custom_call.1} parent=1 // pred_check
      _
    $region11: #{tpu_custom_call.1} parent=1 // pred_check_branch
      %16 = sbr.rel (0) target = $region13
    $region12: #{tpu_custom_call.1} parent=1 // pred_region
      _
    $region13: #{tpu_custom_call.1} parent=1 // pred_fallthru
      _
    // Predicated region
    $region14: #{tpu_custom_call.1} parent=1 // pred_check
      _
    $region15: #{tpu_custom_call.1} parent=1 // pred_check_branch
      %18 = sbr.rel (0) target = $region17
    $region16: #{tpu_custom_call.1} parent=1 // pred_region
      _
    $region17: #{tpu_custom_call.1} parent=1 // pred_fallthru
      _
    // Predicated region
    $region18: #{tpu_custom_call.1} parent=1 // pred_check
      _
    $region19: #{tpu_custom_call.1} parent=1 // pred_check_branch
      %20 = sbr.rel (0) target = $region21
    $region20: #{tpu_custom_call.1} parent=1 // pred_region
      _
    $region21: #{tpu_custom_call.1} parent=1 // pred_fallthru
      _
    %v21 = vld [vmem:[%s0] sm:$0xff]
    %v22 = vld [vmem:[%s0 + $0x8] sm:$0xff]
    %v23 = vld [vmem:[%s0 + $0x10] sm:$0xff]
    %v24 = vld [vmem:[%s0 + $0x18] sm:$0xff]
    %v25 = vld [vmem:[%s0 + $0x20] sm:$0xff]
    %v26 = vld [vmem:[%s0 + $0x28] sm:$0xff]
    %v27 = vld [vmem:[%s0 + $0x30] sm:$0xff]
    %v28 = vld [vmem:[%s0 + $0x38] sm:$0xff]
    %v29 = vld [vmem:[%s1] sm:$0xff]
    %v30 = vld [vmem:[%s1 + $0x8] sm:$0xff]
    %v31 = vld [vmem:[%s1 + $0x10] sm:$0xff]
    %v32 = vld [vmem:[%s1 + $0x18] sm:$0xff]
    %v33 = vld [vmem:[%s2] sm:$0x1]
    %v35 = vlaneseq
    %v36 = vshrl.u32 %v35, 7
    %v37 = vsub.s32 0, %v36
    %v38 = vrot.slane %v33, %v37
    %vm40 = vcmask 261120
    %v42 = vsel %vm40, %v21, 0
    %v45 = vsel %vm40, %v22, 0
    %v48 = vsel %vm40, %v23, 0
    %v51 = vsel %vm40, %v24, 0
    %v54 = vsel %vm40, %v25, 0
    %v57 = vsel %vm40, %v26, 0
    %v60 = vsel %vm40, %v27, 0
    %v63 = vsel %vm40, %v28, 0
    %65 = vmatprep.subr.mxu0 0.0
    %66 = vmatpush1.msra.mxu0 %v29
    %67 = vmatprep.subr.mxu0 0.0
    %68 = vmatpush1.msra.mxu0 %v30
    %69 = vmatprep.subr.mxu0 0.0
    %70 = vmatpush1.msra.mxu0 %v31
    %71 = vmatprep.subr.mxu0 0.0
    %72 = vmatpush1.msra.mxu0 %v32
    %73 = vmatprep.subr.mxu0 0.0
    %74 = vmatpush1.msra.mxu0 0.0
    %75 = vmatprep.subr.mxu0 0.0
    %76 = vmatpush1.msra.mxu0 0.0
    %77 = vmatprep.subr.mxu0 0.0
    %78 = vmatpush1.msra.mxu0 0.0
    %79 = vmatprep.subr.mxu0 0.0
    %80 = vmatpush1.msra.mxu0 0.0
    %81 = vmatprep.subr.mxu0 0.0
    %82 = vmatpush1.msra.mxu0 0.0
    %83 = vmatprep.subr.mxu0 0.0
    %84 = vmatpush1.msra.mxu0 0.0
    %85 = vmatprep.subr.mxu0 0.0
    %86 = vmatpush1.msra.mxu0 0.0
    %87 = vmatprep.subr.mxu0 0.0
    %88 = vmatpush1.msra.mxu0 0.0
    %89 = vmatprep.subr.mxu0 0.0
    %90 = vmatpush1.msra.mxu0 0.0
    %91 = vmatprep.subr.mxu0 0.0
    %92 = vmatpush1.msra.mxu0 0.0
    %93 = vmatprep.subr.mxu0 0.0
    %94 = vmatpush1.msra.mxu0 0.0
    %95 = vmatprep.subr.mxu0 0.0
    %96 = vmatpush1.msra.mxu0 0.0
    %97 = vmatprep.subr.mxu0 0.0
    %98 = vmatpush1.msra.mxu0 0.0
    %99 = vmatprep.subr.mxu0 0.0
    %100 = vmatpush1.msra.mxu0 0.0
    %101 = vmatprep.subr.mxu0 0.0
    %102 = vmatpush1.msra.mxu0 0.0
    %103 = vmatprep.subr.mxu0 0.0
    %104 = vmatpush1.msra.mxu0 0.0
    %105 = vmatprep.subr.mxu0 0.0
    %106 = vmatpush1.msra.mxu0 0.0
    %107 = vmatprep.subr.mxu0 0.0
    %108 = vmatpush1.msra.mxu0 0.0
    %109 = vmatprep.subr.mxu0 0.0
    %110 = vmatpush1.msra.mxu0 0.0
    %111 = vmatprep.subr.mxu0 0.0
    %112 = vmatpush1.msra.mxu0 0.0
    %113 = vmatprep.subr.mxu0 0.0
    %114 = vmatpush1.msra.mxu0 0.0
    %115 = vmatprep.subr.mxu0 0.0
    %116 = vmatpush1.msra.mxu0 0.0
    %117 = vmatprep.subr.mxu0 0.0
    %118 = vmatpush1.msra.mxu0 0.0
    %119 = vmatprep.subr.mxu0 0.0
    %120 = vmatpush1.msra.mxu0 0.0
    %121 = vmatprep.subr.mxu0 0.0
    %122 = vmatpush1.msra.mxu0 0.0
    %123 = vmatprep.subr.mxu0 0.0
    %124 = vmatpush1.msra.mxu0 0.0
    %125 = vmatprep.subr.mxu0 0.0
    %126 = vmatpush1.msra.mxu0 0.0
    %127 = vmatprep.subr.mxu0 0.0
    %128 = vmatpush1.msra.mxu0 0.0
    %129 = vmatprep.mubr.f32.mxu0 0.0
    %130 = vmatmul.mubr.f32.gmra.mrb[0].mxu0 %v42
    %v131 = vpop.f32.mrb[0].mxu0
    %v132 = vadd.f32 %v38, %v131
    %v133 = vpop.f32.mrb[0].mxu0
    %134 = vmatprep.mubr.f32.mxu0 0.0
    %135 = vmatmul.mubr.f32.gmra.mrb[0].mxu0 %v45
    %v136 = vpop.f32.mrb[0].mxu0
    %v137 = vadd.f32 %v38, %v136
    %v138 = vpop.f32.mrb[0].mxu0
    %139 = vmatprep.mubr.f32.mxu0 0.0
    %140 = vmatmul.mubr.f32.gmra.mrb[0].mxu0 %v48
    %v141 = vpop.f32.mrb[0].mxu0
    %v142 = vadd.f32 %v38, %v141
    %v143 = vpop.f32.mrb[0].mxu0
    %144 = vmatprep.mubr.f32.mxu0 0.0
    %145 = vmatmul.mubr.f32.gmra.mrb[0].mxu0 %v51
    %v146 = vpop.f32.mrb[0].mxu0
    %v147 = vadd.f32 %v38, %v146
    %v148 = vpop.f32.mrb[0].mxu0
    %149 = vmatprep.mubr.f32.mxu0 0.0
    %150 = vmatmul.mubr.f32.gmra.mrb[0].mxu0 %v54
    %v151 = vpop.f32.mrb[0].mxu0
    %v152 = vadd.f32 %v38, %v151
    %v153 = vpop.f32.mrb[0].mxu0
    %154 = vmatprep.mubr.f32.mxu0 0.0
    %155 = vmatmul.mubr.f32.gmra.mrb[0].mxu0 %v57
    %v156 = vpop.f32.mrb[0].mxu0
    %v157 = vadd.f32 %v38, %v156
    %v158 = vpop.f32.mrb[0].mxu0
    %159 = vmatprep.mubr.f32.mxu0 0.0
    %160 = vmatmul.mubr.f32.gmra.mrb[0].mxu0 %v60
    %v161 = vpop.f32.mrb[0].mxu0
    %v162 = vadd.f32 %v38, %v161
    %v163 = vpop.f32.mrb[0].mxu0
    %164 = vmatprep.mubr.f32.mxu0 0.0
    %165 = vmatmul.mubr.f32.gmra.mrb[0].mxu0 %v63
    %v166 = vpop.f32.mrb[0].mxu0
    %v167 = vadd.f32 %v38, %v166
    %v168 = vpop.f32.mrb[0].mxu0
    %169 = vdwg.mxu0
    %vm170 = vcmask 523264
    %v171 = vsel %vm170, %v132, -inf
    %172 = vmax.xlane.f32.xlu0 %v171
    %v173 = vpop.xlane.xlu0 %172
    %v174 = vsel %vm170, %v137, -inf
    %175 = vmax.xlane.f32.xlu0 %v174
    %v176 = vpop.xlane.xlu0 %175
    %v177 = vsel %vm170, %v142, -inf
    %178 = vmax.xlane.f32.xlu0 %v177
    %v179 = vpop.xlane.xlu0 %178
    %v180 = vsel %vm170, %v147, -inf
    %181 = vmax.xlane.f32.xlu0 %v180
    %v182 = vpop.xlane.xlu0 %181
    %v183 = vsel %vm170, %v152, -inf
    %184 = vmax.xlane.f32.xlu0 %v183
    %v185 = vpop.xlane.xlu0 %184
    %v186 = vsel %vm170, %v157, -inf
    %187 = vmax.xlane.f32.xlu0 %v186
    %v188 = vpop.xlane.xlu0 %187
    %v189 = vsel %vm170, %v162, -inf
    %190 = vmax.xlane.f32.xlu0 %v189
    %v191 = vpop.xlane.xlu0 %190
    %v192 = vsel %vm170, %v167, -inf
    %193 = vmax.xlane.f32.xlu0 %v192
    %v194 = vpop.xlane.xlu0 %193
    %v195 = vsub.f32 %v132, %v173
    %v196 = vsub.f32 %v137, %v176
    %v197 = vsub.f32 %v142, %v179
    %v198 = vsub.f32 %v147, %v182
    %v199 = vsub.f32 %v152, %v185
    %v200 = vsub.f32 %v157, %v188
    %v201 = vsub.f32 %v162, %v191
    %v202 = vsub.f32 %v167, %v194
    %v203 = vmul.f32 %v195, 1.442695
    %v204 = vpow.pop %v203
    %v205 = vmul.f32 %v196, 1.442695
    %v206 = vpow.pop %v205
    %v207 = vmul.f32 %v197, 1.442695
    %v208 = vpow.pop %v207
    %v209 = vmul.f32 %v198, 1.442695
    %v210 = vpow.pop %v209
    %v211 = vmul.f32 %v199, 1.442695
    %v212 = vpow.pop %v211
    %v213 = vmul.f32 %v200, 1.442695
    %v214 = vpow.pop %v213
    %v215 = vmul.f32 %v201, 1.442695
    %v216 = vpow.pop %v215
    %v217 = vmul.f32 %v202, 1.442695
    %v218 = vpow.pop %v217
    %v219 = vsel %vm170, %v204, 0.0
    %220 = vadd.xlane.f32.xlu0 %v219
    %v221 = vpop.xlane.xlu0 %220
    %v222 = vsel %vm170, %v206, 0.0
    %223 = vadd.xlane.f32.xlu0 %v222
    %v224 = vpop.xlane.xlu0 %223
    %v225 = vsel %vm170, %v208, 0.0
    %226 = vadd.xlane.f32.xlu0 %v225
    %v227 = vpop.xlane.xlu0 %226
    %v228 = vsel %vm170, %v210, 0.0
    %229 = vadd.xlane.f32.xlu0 %v228
    %v230 = vpop.xlane.xlu0 %229
    %v231 = vsel %vm170, %v212, 0.0
    %232 = vadd.xlane.f32.xlu0 %v231
    %v233 = vpop.xlane.xlu0 %232
    %v234 = vsel %vm170, %v214, 0.0
    %235 = vadd.xlane.f32.xlu0 %v234
    %v236 = vpop.xlane.xlu0 %235
    %v237 = vsel %vm170, %v216, 0.0
    %238 = vadd.xlane.f32.xlu0 %v237
    %v239 = vpop.xlane.xlu0 %238
    %v240 = vsel %vm170, %v218, 0.0
    %241 = vadd.xlane.f32.xlu0 %v240
    %v242 = vpop.xlane.xlu0 %241
    %v243 = vld [vmem:[%s3] sm:$0xff]
    %v244 = vld [vmem:[%s3 + $0x8] sm:$0xff]
    %v245 = vld [vmem:[%s3 + $0x10] sm:$0xff]
    %v246 = vld [vmem:[%s3 + $0x18] sm:$0xff]
    %v247 = vld [vmem:[%s3 + $0x20] sm:$0xff]
    %v248 = vld [vmem:[%s3 + $0x28] sm:$0xff]
    %v249 = vld [vmem:[%s3 + $0x30] sm:$0xff]
    %v250 = vld [vmem:[%s3 + $0x38] sm:$0xff]
    %v252 = vsel %vm170, %v204, 0
    %v255 = vsel %vm170, %v206, 0
    %v258 = vsel %vm170, %v208, 0
    %v261 = vsel %vm170, %v210, 0
    %v264 = vsel %vm170, %v212, 0
    %v267 = vsel %vm170, %v214, 0
    %v270 = vsel %vm170, %v216, 0
    %v273 = vsel %vm170, %v218, 0
    %275 = vmatprep.subr.mxu0 0.0
    %276 = vmatpush1.msra.mxu0 %v243
    %277 = vmatprep.subr.mxu0 0.0
    %278 = vmatpush1.msra.mxu0 %v244
    %279 = vmatprep.subr.mxu0 0.0
    %280 = vmatpush1.msra.mxu0 %v245
    %281 = vmatprep.subr.mxu0 0.0
    %282 = vmatpush1.msra.mxu0 %v246
    %283 = vmatprep.subr.mxu0 0.0
    %284 = vmatpush1.msra.mxu0 %v247
    %285 = vmatprep.subr.mxu0 0.0
    %286 = vmatpush1.msra.mxu0 %v248
    %287 = vmatprep.subr.mxu0 0.0
    %288 = vmatpush1.msra.mxu0 %v249
    %289 = vmatprep.subr.mxu0 0.0
    %290 = vmatpush1.msra.mxu0 %v250
    %291 = vmatprep.subr.mxu0 0.0
    %292 = vmatpush1.msra.mxu0 0.0
    %293 = vmatprep.subr.mxu0 0.0
    %294 = vmatpush1.msra.mxu0 0.0
    %295 = vmatprep.subr.mxu0 0.0
    %296 = vmatpush1.msra.mxu0 0.0
    %297 = vmatprep.subr.mxu0 0.0
    %298 = vmatpush1.msra.mxu0 0.0
    %299 = vmatprep.subr.mxu0 0.0
    %300 = vmatpush1.msra.mxu0 0.0
    %301 = vmatprep.subr.mxu0 0.0
    %302 = vmatpush1.msra.mxu0 0.0
    %303 = vmatprep.subr.mxu0 0.0
    %304 = vmatpush1.msra.mxu0 0.0
    %305 = vmatprep.subr.mxu0 0.0
    %306 = vmatpush1.msra.mxu0 0.0
    %307 = vmatprep.subr.mxu0 0.0
    %308 = vmatpush1.msra.mxu0 0.0
    %309 = vmatprep.subr.mxu0 0.0
    %310 = vmatpush1.msra.mxu0 0.0
    %311 = vmatprep.subr.mxu0 0.0
    %312 = vmatpush1.msra.mxu0 0.0
    %313 = vmatprep.subr.mxu0 0.0
    %314 = vmatpush1.msra.mxu0 0.0
    %315 = vmatprep.subr.mxu0 0.0
    %316 = vmatpush1.msra.mxu0 0.0
    %317 = vmatprep.subr.mxu0 0.0
    %318 = vmatpush1.msra.mxu0 0.0
    %319 = vmatprep.subr.mxu0 0.0
    %320 = vmatpush1.msra.mxu0 0.0
    %321 = vmatprep.subr.mxu0 0.0
    %322 = vmatpush1.msra.mxu0 0.0
    %323 = vmatprep.subr.mxu0 0.0
    %324 = vmatpush1.msra.mxu0 0.0
    %325 = vmatprep.subr.mxu0 0.0
    %326 = vmatpush1.msra.mxu0 0.0
    %327 = vmatprep.subr.mxu0 0.0
    %328 = vmatpush1.msra.mxu0 0.0
    %329 = vmatprep.subr.mxu0 0.0
    %330 = vmatpush1.msra.mxu0 0.0
    %331 = vmatprep.subr.mxu0 0.0
    %332 = vmatpush1.msra.mxu0 0.0
    %333 = vmatprep.subr.mxu0 0.0
    %334 = vmatpush1.msra.mxu0 0.0
    %335 = vmatprep.subr.mxu0 0.0
    %336 = vmatpush1.msra.mxu0 0.0
    %337 = vmatprep.subr.mxu0 0.0
    %338 = vmatpush1.msra.mxu0 0.0
    %339 = vmatprep.mubr.f32.mxu0 0.0
    %340 = vmatmul.mubr.f32.gmra.mrb[0].mxu0 %v252
    %v341 = vpop.f32.mrb[0].mxu0
    %v342 = vadd.f32 0.0, %v341
    %v343 = vpop.f32.mrb[0].mxu0
    %344 = vmatprep.mubr.f32.mxu0 0.0
    %345 = vmatmul.mubr.f32.gmra.mrb[0].mxu0 %v255
    %v346 = vpop.f32.mrb[0].mxu0
    %v347 = vadd.f32 0.0, %v346
    %v348 = vpop.f32.mrb[0].mxu0
    %349 = vmatprep.mubr.f32.mxu0 0.0
    %350 = vmatmul.mubr.f32.gmra.mrb[0].mxu0 %v258
    %v351 = vpop.f32.mrb[0].mxu0
    %v352 = vadd.f32 0.0, %v351
    %v353 = vpop.f32.mrb[0].mxu0
    %354 = vmatprep.mubr.f32.mxu0 0.0
    %355 = vmatmul.mubr.f32.gmra.mrb[0].mxu0 %v261
    %v356 = vpop.f32.mrb[0].mxu0
    %v357 = vadd.f32 0.0, %v356
    %v358 = vpop.f32.mrb[0].mxu0
    %359 = vmatprep.mubr.f32.mxu0 0.0
    %360 = vmatmul.mubr.f32.gmra.mrb[0].mxu0 %v264
    %v361 = vpop.f32.mrb[0].mxu0
    %v362 = vadd.f32 0.0, %v361
    %v363 = vpop.f32.mrb[0].mxu0
    %364 = vmatprep.mubr.f32.mxu0 0.0
    %365 = vmatmul.mubr.f32.gmra.mrb[0].mxu0 %v267
    %v366 = vpop.f32.mrb[0].mxu0
    %v367 = vadd.f32 0.0, %v366
    %v368 = vpop.f32.mrb[0].mxu0
    %369 = vmatprep.mubr.f32.mxu0 0.0
    %370 = vmatmul.mubr.f32.gmra.mrb[0].mxu0 %v270
    %v371 = vpop.f32.mrb[0].mxu0
    %v372 = vadd.f32 0.0, %v371
    %v373 = vpop.f32.mrb[0].mxu0
    %374 = vmatprep.mubr.f32.mxu0 0.0
    %375 = vmatmul.mubr.f32.gmra.mrb[0].mxu0 %v273
    %v376 = vpop.f32.mrb[0].mxu0
    %v377 = vadd.f32 0.0, %v376
    %v378 = vpop.f32.mrb[0].mxu0
    %379 = vdwg.mxu0
    %v380 = vrcp.pop %v221
    %v381 = vrcp.pop %v224
    %v382 = vrcp.pop %v227
    %v383 = vrcp.pop %v230
    %v384 = vrcp.pop %v233
    %v385 = vrcp.pop %v236
    %v386 = vrcp.pop %v239
    %v387 = vrcp.pop %v242
    %v388 = vmul.f32 %v342, %v380
    %v389 = vmul.f32 %v347, %v381
    %v390 = vmul.f32 %v352, %v382
    %v391 = vmul.f32 %v357, %v383
    %v392 = vmul.f32 %v362, %v384
    %v393 = vmul.f32 %v367, %v385
    %v394 = vmul.f32 %v372, %v386
    %v395 = vmul.f32 %v377, %v387
    %v396 = vld [vmem:[%s4] sm:$0x1]
    %v398 = vlaneseq
    %v399 = vshrl.u32 %v398, 7
    %v400 = vsub.s32 0, %v399
    %v401 = vrot.slane %v396, %v400
    %v403 = vadd.f32 %v388, %v401
    %v404 = vadd.f32 %v389, %v401
    %v405 = vadd.f32 %v390, %v401
    %v406 = vadd.f32 %v391, %v401
    %v407 = vadd.f32 %v392, %v401
    %v408 = vadd.f32 %v393, %v401
    %v409 = vadd.f32 %v394, %v401
    %v410 = vadd.f32 %v395, %v401
    %411 = vst [vmem:[#allocation2] sm:$0xff] %v403
    %412 = vst [vmem:[#allocation2 + $0x8] sm:$0xff] %v404
    %413 = vst [vmem:[#allocation2 + $0x10] sm:$0xff] %v405
    %414 = vst [vmem:[#allocation2 + $0x18] sm:$0xff] %v406
    %415 = vst [vmem:[#allocation2 + $0x20] sm:$0xff] %v407
    %416 = vst [vmem:[#allocation2 + $0x28] sm:$0xff] %v408
    %417 = vst [vmem:[#allocation2 + $0x30] sm:$0xff] %v409
    %418 = vst [vmem:[#allocation2 + $0x38] sm:$0xff] %v410
    // Predicated region
    $region22: #{tpu_custom_call.1} parent=1 // pred_check
      _
    $region23: #{tpu_custom_call.1} parent=1 // pred_check_branch
      %420 = sbr.rel (0) target = $region25
    $region24: #{tpu_custom_call.1} parent=1 // pred_region
      %s422 = ssub.s32 1024, 1024
      %423 = vsyncadd [#allocation3], %s422
      %s424 = sshll.u32 [#allocation2], 4
      %s425 = int_to_ptr.vmem [resolvable:$true] %s424
      %430 = dma.vmem_to_hbm [thread:$0]  %s425, 1024, %s5, [#allocation3], 128, 128, 8
    $region25: #{tpu_custom_call.1} parent=1 // pred_fallthru
      _
    // Predicated region
    $region26: #{tpu_custom_call.1} parent=1 // pred_check
      _
    $region27: #{tpu_custom_call.1} parent=1 // pred_check_branch
      %432 = sbr.rel (0) target = $region29
    $region28: #{tpu_custom_call.1} parent=1 // pred_region
      %433 = dma.done [#allocation3], 1024
    $region29: #{tpu_custom_call.1} parent=1 // pred_fallthru
      _
    %434 = vsyncpa [#allocation3], 1

</llo_original>
